<compile_context>
chip_gen: v7x
topology: tpu7x:2x2x1
jax: 0.10.0
libtpu: 0.0.40
codegen_flags: <defaults>
</compile_context>

<pallas_src>
import jax
import jax.numpy as jnp
from jax.experimental import pallas as pl
from jax.experimental.pallas import tpu as pltpu


_TARGET_TILE_BYTES = 4 * 1024 * 1024    # ~4 MiB/tile -> 16 MiB double-buffered in+out
_MIN_TILE_BYTES = 256 * 1024            # don't shrink tiles below the roofline knee
_MIN_BLOCKS = 8                         # keep the grid shardable (v7x: 2 TCs) + pipelined
_VMEM_LIMIT_BYTES = 32 * 1024 * 1024    # explicit: v5e's scoped-VMEM default is 16 MiB
_MAX_FOLD_LANE = 16384                  # widest lane fold considered
_SMALL_INPUT_BYTES = 1024 * 1024        # below this a fused XLA clip beats a launch


def _make_clamp_kernel(min_value, max_value):
    def kernel(x_ref, o_ref):
        x = x_ref[...]
        lo = jnp.asarray(min_value, x.dtype)
        hi = jnp.asarray(max_value, x.dtype)
        # torch.clamp order: min first, then max (min > max -> max everywhere).
        o_ref[...] = jnp.minimum(jnp.maximum(x, lo), hi)
    return kernel


def _xla_clamp(x, min_value, max_value):
    lo = jnp.asarray(min_value, x.dtype)
    hi = jnp.asarray(max_value, x.dtype)
    return jnp.minimum(jnp.maximum(x, lo), hi)


def _fold_2d(x, sub_min):
    """Lane-dense 2-D view of x (pure reshape: no padding, no extra HBM pass)."""
    total = x.size
    # 1) Widest 128-multiple divisor (unmasked lane stores). Prefer folds whose
    #    sublane extent is >= sub_min so vregs / VMEM tiles are fully used.
    lane_hi = (min(total, _MAX_FOLD_LANE) // 128) * 128
    fallback = None
    for lane in range(lane_hi, 127, -128):
        if total % lane == 0:
            if total // lane >= sub_min:
                return x.reshape(total // lane, lane)
            if fallback is None:
                fallback = lane
    if fallback is not None:
        return x.reshape(total // fallback, fallback)
    # 2) Any divisor >= 128 (lane-dense; ragged lane edge masked per row).
    for lane in range(min(total, 8192), 127, -1):
        if total % lane == 0:
            return x.reshape(total // lane, lane)
    # 3) No usable divisor (e.g. prime-ish sizes): single-row view; lane tiles
    #    are 128-multiples with one masked edge block. HBM DMA stays contiguous.
    return x.reshape(1, total)


def _select_tiles(M, N, itemsize, sub_min):
    """Pick (tm, tn): ~4 MiB tiles, >= _MIN_BLOCKS blocks on large arrays."""
    total_bytes = M * N * itemsize
    budget = _TARGET_TILE_BYTES
    if total_bytes > _MIN_BLOCKS * _MIN_TILE_BYTES:
        # Guarantee several grid blocks so "parallel" axes can be sharded
        # across TensorCores and the DMA pipeline stays busy.
        budget = min(budget, max(_MIN_TILE_BYTES, total_bytes // _MIN_BLOCKS))

    row_bytes = N * itemsize
    if row_bytes * sub_min <= budget:
        # Full-width rows (fully contiguous DMA); grow the sublane tile.
        tn = N
        tm = max(sub_min, (budget // row_bytes // sub_min) * sub_min)
        if tm >= M:
            tm = M                      # full extent -- always legal
    else:
        # Rows wider than one tile (or M tiny): tile lanes in 128-multiples.
        tm = M if M < sub_min else sub_min
        padded_rows = sub_min           # VMEM rounds the sublane extent up
        tn = max(128, (budget // (padded_rows * itemsize) // 128) * 128)
        if tn >= N:
            tn = N                      # full extent -- always legal
    return tm, tn


def clamp(x: jax.Array, min_value: float, max_value: float,
          *, force_pallas: bool = False, in_place: bool = False) -> jax.Array:
    """Forward pass of the Clamp module."""
    min_value = float(min_value)
    max_value = float(max_value)

    if x.size == 0:
        return x

    if not jnp.issubdtype(x.dtype, jnp.floating):
        # torch.clamp with 0-dim float32 tensor bounds type-promotes integer
        # inputs to float32; mirror that on a plain-XLA path (avoids silently
        # truncating the bounds to the integer dtype).
        dt = jnp.promote_types(x.dtype, jnp.float32)
        return _xla_clamp(x.astype(dt), min_value, max_value)

    nbytes = x.size * x.dtype.itemsize
    if not force_pallas and nbytes < _SMALL_INPUT_BYTES:
        # Small tensors: let XLA fuse the clip into neighbours; a standalone
        # pallas_call would be launch/step-overhead dominated.
        return _xla_clamp(x, min_value, max_value)

    orig_shape = x.shape
    itemsize = x.dtype.itemsize
    sub_min = {4: 8, 2: 16, 1: 32}.get(itemsize, 8)

    x2 = _fold_2d(x, sub_min)
    M, N = x2.shape
    tm, tn = _select_tiles(M, N, itemsize, sub_min)
    grid = (pl.cdiv(M, tm), pl.cdiv(N, tn))

    out2 = pl.pallas_call(
        _make_clamp_kernel(min_value, max_value),
        out_shape=jax.ShapeDtypeStruct((M, N), x2.dtype),
        grid=grid,
        in_specs=[pl.BlockSpec((tm, tn), lambda i, j: (i, j))],
        out_specs=pl.BlockSpec((tm, tn), lambda i, j: (i, j)),
        compiler_params=pltpu.CompilerParams(
            dimension_semantics=("parallel", "parallel"),
            vmem_limit_bytes=_VMEM_LIMIT_BYTES),
        cost_estimate=pl.CostEstimate(
            flops=2 * M * N,
            transcendentals=0,
            bytes_accessed=2 * M * N * itemsize),
        # In-place only when requested (pair with jit donation); in eager mode
        # aliasing would force XLA to insert a defensive copy of the input.
        input_output_aliases={0: 0} if in_place else {},
    )(x2)

    return out2.reshape(orig_shape)


class Clamp:
    """Mirror of the PyTorch Clamp module (min/max are static float buffers)."""

    def __init__(self, min_value: float, max_value: float):
        self.min_value = float(min_value)
        self.max_value = float(max_value)

    def __call__(self, x: jax.Array, **kwargs) -> jax.Array:
        return clamp(x, self.min_value, self.max_value, **kwargs)


if __name__ == "__main__":
    k0, k1, k2 = jax.random.split(jax.random.PRNGKey(0), 3)
    module = Clamp(min_value=-0.5, max_value=0.5)

    # Spec-sized input: batch=2, channels=4, spatial=16x16 (float32).
    x = jax.random.normal(k0, (2, 4, 16, 16), dtype=jnp.float32) * 3.0
    out = jax.block_until_ready(module(x, force_pallas=True))
    ref = jnp.minimum(jnp.maximum(x, -0.5), 0.5)
    assert out.shape == x.shape and out.dtype == x.dtype
    assert bool(jnp.allclose(out, ref))
    assert bool(jnp.all(out >= -0.5)) and bool(jnp.all(out <= 0.5))

    # Ragged shape with no 128-multiple divisor: exercises the divisor fold
    # (lane-dense full-extent lane block, masked lane edge, no padding).
    y = jax.random.normal(k1, (40, 4200), dtype=jnp.float32) * 3.0
    out2 = jax.block_until_ready(module(y, force_pallas=True))
    ref2 = jnp.minimum(jnp.maximum(y, -0.5), 0.5)
    assert out2.shape == y.shape and out2.dtype == y.dtype
    assert bool(jnp.allclose(out2, ref2))

    # bfloat16 + small-input XLA fast path.
    z = (jax.random.normal(k2, (8, 32), dtype=jnp.float32) * 3.0).astype(jnp.bfloat16)
    out3 = jax.block_until_ready(module(z))
    ref3 = jnp.minimum(jnp.maximum(z, jnp.asarray(-0.5, z.dtype)),
                       jnp.asarray(0.5, z.dtype))
    assert out3.shape == z.shape and out3.dtype == z.dtype
    assert bool(jnp.allclose(out3.astype(jnp.float32), ref3.astype(jnp.float32)))

    print("KERNEL_OK")
</pallas_src>

<mosaic_0001>
module attributes {stable_mosaic.version = 11 : i64} {
  func.func @kernel(%arg0: i32, %arg1: i32, %arg2: memref<8x256xf32, #tpu.memory_space<vmem>>, %arg3: memref<8x256xf32, #tpu.memory_space<vmem>>) attributes {dimension_semantics = [#tpu.dimension_semantics<parallel>, #tpu.dimension_semantics<parallel>], iteration_bounds = array<i64: 1, 1>, scalar_prefetch = 0 : i64, scratch_operands = 0 : i64, tpu.core_type = #tpu.core_type<tc>, window_params = [{transform_indices = @transform_0, window_bounds = array<i64: 8, 256>}, {transform_indices = @transform_1, window_bounds = array<i64: 8, 256>}]} {
    %c0 = arith.constant 0 : index
    %c0_0 = arith.constant 0 : index
    %0 = vector.load %arg2[%c0, %c0_0] : memref<8x256xf32, #tpu.memory_space<vmem>>, vector<8x256xf32>
    %cst = arith.constant -5.000000e-01 : f32
    %1 = vector.broadcast %cst : f32 to vector<8x256xf32>
    %2 = arith.maximumf %0, %1 : vector<8x256xf32>
    %cst_1 = arith.constant 5.000000e-01 : f32
    %3 = vector.broadcast %cst_1 : f32 to vector<8x256xf32>
    %4 = arith.minimumf %2, %3 : vector<8x256xf32>
    %c0_2 = arith.constant 0 : index
    %c0_3 = arith.constant 0 : index
    %5 = vector.load %arg3[%c0_2, %c0_3] : memref<8x256xf32, #tpu.memory_space<vmem>>, vector<8x256xf32>
    tpu.vector_store %arg3[%c0_2, %c0_3], %4 {strides = array<i32>} : memref<8x256xf32, #tpu.memory_space<vmem>>, vector<8x256xf32>,
    return
  }
  func.func @transform_0(%arg0: i32, %arg1: i32) -> (i32, i32) {
    %c0_i32 = arith.constant 0 : i32
    return %arg0, %arg1 : i32, i32
  }
  func.func @transform_1(%arg0: i32, %arg1: i32) -> (i32, i32) {
    %c0_i32 = arith.constant 0 : i32
    return %arg0, %arg1 : i32, i32
  }
}

</mosaic_0001>

<llo_original>
// kernel: tpu_custom_call.1
$region0: #{tpu_custom_call.1}
  #allocation0 [shape = 'u32[]', space=smem, size = 0x4, offset = 0x4, fixed_abs, tag = 'smem constant byte address 0x4 - core index']
  #allocation1 [shape = 'u32[144,128]{1,0:T(1,128)}', space=vmem, size = 0x12000, scoped, tag = 'internal scratch']
  %s0 = inlined_call_operand.hbm [shape: f32[8,256], index: 0, kind: input, shape index: {}]
  %s1 = inlined_call_operand.hbm [shape: f32[8,256], index: 1, kind: output, shape index: {}]
  %s2 = sld [smem:[#allocation0]]
  $region18: #{tpu_custom_call.1} parent=0
    _
  %s4 = ssub.s32 1, %s2
  %s5 = scalar_select 0, %s4, %s2
  $region1: #{tpu_custom_call.1} parent=0
    #allocation2 [shape = 'u8[8192]{0}', space=vmem, size = 0x2000, scoped, tag = 'input window, operand 0, single buffered']
    #allocation3 [shape = 's32[1]{0}', space=sflag, size = 0x4, scoped, tag = 'scoped memory for tpu_custom_call.1']
    #allocation4 [shape = 's32[1]{0}', space=sflag, size = 0x4, scoped, tag = 'scoped memory for tpu_custom_call.1']
    #allocation5 [shape = 'u8[8192]{0}', space=vmem, size = 0x2000, scoped, tag = 'output window, operand 0, single buffered']
    %6 = vsyncpa [#allocation3], 0
    %7 = vsyncpa [#allocation4], 0
    // Predicated region
    $region2: #{tpu_custom_call.1} parent=1 // pred_check
      _
    $region3: #{tpu_custom_call.1} parent=1 // pred_check_branch
      %9 = sbr.rel (0) target = $region5
    $region4: #{tpu_custom_call.1} parent=1 // pred_region
      %s11 = ssub.s32 256, 256
      %12 = vsyncadd [#allocation3], %s11
      %s14 = sshll.u32 [#allocation2], 4
      %s15 = int_to_ptr.vmem [resolvable:$true] %s14
      %17 = dma.hbm_to_vmem [thread:$0]  %s0, 256, %s15, [#allocation3]
    $region5: #{tpu_custom_call.1} parent=1 // pred_fallthru
      _
    // Predicated region
    $region6: #{tpu_custom_call.1} parent=1 // pred_check
      _
    $region7: #{tpu_custom_call.1} parent=1 // pred_check_branch
      %19 = sbr.rel (0) target = $region9
    $region8: #{tpu_custom_call.1} parent=1 // pred_region
      %20 = dma.done [#allocation3], 256
    $region9: #{tpu_custom_call.1} parent=1 // pred_fallthru
      _
    %v21 = vld [vmem:[#allocation2] sm:$0xff]
    %v22 = vld [vmem:[#allocation2 + $0x8] sm:$0xff]
    %v23 = vmax.f32 %v21, -0.5
    %v24 = vmax.f32 %v22, -0.5
    %v25 = vmin.f32 %v23, 0.5
    %v26 = vmin.f32 %v24, 0.5
    %27 = vst [vmem:[#allocation5] sm:$0xff] %v25
    %28 = vst [vmem:[#allocation5 + $0x8] sm:$0xff] %v26
    // Predicated region
    $region10: #{tpu_custom_call.1} parent=1 // pred_check
      _
    $region11: #{tpu_custom_call.1} parent=1 // pred_check_branch
      %30 = sbr.rel (0) target = $region13
    $region12: #{tpu_custom_call.1} parent=1 // pred_region
      %s32 = ssub.s32 256, 256
      %33 = vsyncadd [#allocation4], %s32
      %s35 = sshll.u32 [#allocation5], 4
      %s36 = int_to_ptr.vmem [resolvable:$true] %s35
      %38 = dma.vmem_to_hbm [thread:$0]  %s36, 256, %s1, [#allocation4]
    $region13: #{tpu_custom_call.1} parent=1 // pred_fallthru
      _
    // Predicated region
    $region14: #{tpu_custom_call.1} parent=1 // pred_check
      _
    $region15: #{tpu_custom_call.1} parent=1 // pred_check_branch
      %40 = sbr.rel (0) target = $region17
    $region16: #{tpu_custom_call.1} parent=1 // pred_region
      %41 = dma.done [#allocation4], 256
    $region17: #{tpu_custom_call.1} parent=1 // pred_fallthru
      _
    %42 = vsyncpa [#allocation3], 1
    %43 = vsyncpa [#allocation4], 1

</llo_original>
